<compile_context>
chip_gen: v6e
topology: v6e:2x2x1
jax: 0.10.0
libtpu: 0.0.40
codegen_flags: <defaults>
</compile_context>

<pallas_src>
import math
import functools

import jax
import jax.numpy as jnp
from jax import lax
from jax.experimental import pallas as pl
from jax.experimental.pallas import tpu as pltpu


def _gelu_exact(x):
    # PyTorch nn.GELU() default: x * 0.5 * (1 + erf(x / sqrt(2)))
    return x * 0.5 * (1.0 + lax.erf(x * (1.0 / math.sqrt(2.0))))


def _round_up(x, m):
    return ((x + m - 1) // m) * m


def _choose_seq_tile(l, hb, max_rows):
    """Largest TL with  TL | L,  HB | TL,  TL <= max_rows  (fallback: L)."""
    limit = max(max_rows, hb)
    best = None
    for t in range(hb, l + 1, hb):
        if l % t == 0 and t <= limit:
            best = t
    return l if best is None else best


def _choose_batch_tile(n, tl, n_l, row_budget=512):
    """Largest BT | N with BT*TL <= row_budget, preferring >= 2 grid steps."""
    divs = sorted([d for d in range(1, n + 1) if n % d == 0], reverse=True)
    for d in divs:
        if d * tl <= max(row_budget, tl) and (n // d) * n_l >= 2:
            return d
    for d in divs:
        if d * tl <= max(row_budget, tl):
            return d
    return 1


def _gated_residual_kernel(*refs, bt, tl, tlp, pad_left, pad_right, dilation,
                           ksize, hb, cp, multi_tile, compute_dtype):
    """One (batch tile, seq tile) per grid step.

    refs (multi_tile): x, left_halo, right_halo, w, bias, out, a_scr, s_scr
    refs (single)    : x, w, bias, out, a_scr, s_scr

      x_ref  : (BT, TL, Cp)        current tile (residual + conv centre)
      *_halo : (BT, HB, Cp)        neighbouring rows for the conv window
      w_ref  : (K, Cp, Cp)         per-tap weights (C_in, C_out), compute dtype
      b_ref  : (1, Cp)             bias (f32)
      o_ref  : (BT, TL, Cp)        output
      a_scr  : (BT*TLp, Cp)        zero-padded GELU activation (compute dtype)
      s_scr  : (BT*TLp, Cp)        f32 accumulator (residual + bias + conv)
    """
    if multi_tile:
        x_ref, lh_ref, rh_ref, w_ref, b_ref, o_ref, a_scr, s_scr = refs
    else:
        x_ref, w_ref, b_ref, o_ref, a_scr, s_scr = refs
        lh_ref = rh_ref = None

    total_pad = pad_left + pad_right
    rows = bt * tlp - total_pad            # M dim of the flattened tap matmuls
    inv_sqrt2 = 1.0 / math.sqrt(2.0)
    j = pl.program_id(1)
    n_l = pl.num_programs(1)
    bias = b_ref[...].astype(jnp.float32)  # (1, Cp)

    # ---- stage 1: padded GELU activation into VMEM scratch; accumulator is
    #      initialised with residual + bias (saves an epilogue add pass). -----
    for b in range(bt):
        base = b * tlp
        xb = x_ref[b, :, :].astype(jnp.float32)                      # (TL, Cp)
        a_scr[pl.ds(base + pad_left, tl), :] = _gelu_exact(xb).astype(compute_dtype)
        s_scr[pl.ds(base, tl), :] = xb + bias
        if total_pad > 0:
            # rows between segments: keep the += accumulation below clean.
            s_scr[pl.ds(base + tl, total_pad), :] = jnp.zeros(
                (total_pad, cp), jnp.float32)
        if pad_left > 0:
            if multi_tile:
                halo = _gelu_exact(
                    lh_ref[b, hb - pad_left:, :].astype(jnp.float32))
                halo = jnp.where(j > 0, halo, 0.0)      # sequence edge -> zeros
            else:
                halo = jnp.zeros((pad_left, cp), jnp.float32)
            a_scr[pl.ds(base, pad_left), :] = halo.astype(compute_dtype)
        if pad_right > 0:
            if multi_tile:
                halo = _gelu_exact(
                    rh_ref[b, :pad_right, :].astype(jnp.float32))
                halo = jnp.where(j < n_l - 1, halo, 0.0)
            else:
                halo = jnp.zeros((pad_right, cp), jnp.float32)
            a_scr[pl.ds(base + pad_left + tl, pad_right), :] = halo.astype(
                compute_dtype)

    # ---- stage 2: dilated conv = K shifted (rows, Cp) @ (Cp, Cp) MXU matmuls,
    #      taps read straight from the VMEM scratch, f32 accumulation. --------
    for k in range(ksize):
        tap = a_scr[pl.ds(k * dilation, rows), :]
        s_scr[pl.ds(0, rows), :] += jnp.dot(
            tap, w_ref[k, :, :], preferred_element_type=jnp.float32)

    # ---- stage 3: (x + conv + bias) / sqrt(2) ------------------------------
    for b in range(bt):
        o_ref[b, :, :] = (s_scr[pl.ds(b * tlp, tl), :]
                          * inv_sqrt2).astype(o_ref.dtype)


def gated_residual_nlc(x_nlc, weight, bias, *, kernel_size, dilation,
                       max_rows_per_tile=512):
    """x_nlc: (N, L, C).  weight: (C_out, C_in, K) PyTorch layout.  bias: (C,)."""
    assert kernel_size >= 1 and dilation >= 1
    n, l, c = x_nlc.shape

    total_pad = dilation * (kernel_size - 1)
    pad_left = total_pad // 2
    pad_right = total_pad - pad_left

    # Lane-dense channels: pad C up to a multiple of 128 (zeros are inert:
    # gelu(0)=0, zero weight rows/cols contribute nothing, sliced off at end).
    cp = _round_up(c, 128)
    compute_dtype = jnp.bfloat16 if x_nlc.dtype == jnp.bfloat16 else jnp.float32

    x_p = x_nlc if cp == c else jnp.pad(x_nlc, ((0, 0), (0, 0), (0, cp - c)))

    # (C_out, C_in, K) -> (K, C_in, C_out) so each tap is a right-multiply.
    w = jnp.transpose(weight, (2, 1, 0))
    if cp != c:
        w = jnp.pad(w, ((0, 0), (0, cp - c), (0, cp - c)))
    w = w.astype(compute_dtype)
    b_row = bias if cp == c else jnp.pad(bias, (0, cp - c))
    b_row = b_row.reshape(1, cp).astype(jnp.float32)

    # ---- tiling -------------------------------------------------------------
    hb = max(8, _round_up(max(pad_left, pad_right, 1), 8))   # halo block rows
    tl = _choose_seq_tile(l, hb, max_rows_per_tile)
    n_l = l // tl
    multi_tile = n_l > 1
    bt = _choose_batch_tile(n, tl, n_l)
    tlp = tl + total_pad
    grid = (n // bt, n_l)
    r = tl // hb if multi_tile else 1

    def x_map(b, j):
        return (b, j, 0)

    def lh_map(b, j):   # the HB rows immediately before this seq tile
        return (b, jnp.maximum(j * r - 1, 0), 0)

    def rh_map(b, j):   # the HB rows immediately after this seq tile
        return (b, jnp.minimum((j + 1) * r, l // hb - 1), 0)

    x_spec = pl.BlockSpec((bt, tl, cp), x_map)
    w_spec = pl.BlockSpec((kernel_size, cp, cp), lambda b, j: (0, 0, 0))
    b_spec = pl.BlockSpec((1, cp), lambda b, j: (0, 0))
    out_spec = pl.BlockSpec((bt, tl, cp), x_map)

    if multi_tile:
        in_specs = [x_spec,
                    pl.BlockSpec((bt, hb, cp), lh_map),
                    pl.BlockSpec((bt, hb, cp), rh_map),
                    w_spec, b_spec]
        args = (x_p, x_p, x_p, w, b_row)
    else:
        in_specs = [x_spec, w_spec, b_spec]
        args = (x_p, w, b_row)

    scratch_shapes = [
        pltpu.VMEM((bt * tlp, cp), compute_dtype),   # padded GELU activation
        pltpu.VMEM((bt * tlp, cp), jnp.float32),     # f32 accumulator
    ]

    # VMEM budget estimate (double-buffered blocks + scratch), v7x-safe cap.
    # NOTE: weights have a constant index_map; pl.Buffered(1) could drop their
    # second buffer for very large C, left at the default here.
    isz = jnp.dtype(x_nlc.dtype).itemsize
    csz = jnp.dtype(compute_dtype).itemsize
    blk = bt * tl * cp * isz
    halo = (2 * bt * hb * cp * isz) if multi_tile else 0
    wb = kernel_size * cp * cp * csz + cp * 4
    scr = bt * tlp * cp * (csz + 4)
    est = 2 * (2 * blk + halo + wb) + scr
    vmem_limit = int(min(max(2 * est, 32 * 1024 * 1024), 64 * 1024 * 1024))

    kernel = functools.partial(
        _gated_residual_kernel,
        bt=bt, tl=tl, tlp=tlp, pad_left=pad_left, pad_right=pad_right,
        dilation=dilation, ksize=kernel_size, hb=hb, cp=cp,
        multi_tile=multi_tile, compute_dtype=compute_dtype)

    out = pl.pallas_call(
        kernel,
        out_shape=jax.ShapeDtypeStruct((n, l, cp), x_nlc.dtype),
        grid_spec=pltpu.PrefetchScalarGridSpec(
            num_scalar_prefetch=0,
            grid=grid,
            in_specs=in_specs,
            out_specs=out_spec,
            scratch_shapes=scratch_shapes),
        compiler_params=pltpu.CompilerParams(
            dimension_semantics=("parallel", "parallel"),
            vmem_limit_bytes=vmem_limit),
    )(*args)

    if cp != c:
        out = out[:, :, :c]
    return out


def gated_residual_layer(x_ncl, weight, bias, *, kernel_size, dilation,
                         max_rows_per_tile=512):
    """PyTorch-layout entry point: x_ncl is (N, C, L).

    A model that keeps activations in NLC should call gated_residual_nlc
    directly and avoid these two full-tensor transposes.
    """
    x_nlc = jnp.transpose(x_ncl, (0, 2, 1))
    out_nlc = gated_residual_nlc(x_nlc, weight, bias,
                                 kernel_size=kernel_size, dilation=dilation,
                                 max_rows_per_tile=max_rows_per_tile)
    return jnp.transpose(out_nlc, (0, 2, 1))


def _reference(x_ncl, weight, bias, *, kernel_size, dilation):
    """Pure-JAX f32 reference mirroring the PyTorch module."""
    total_pad = dilation * (kernel_size - 1)
    pad_left = total_pad // 2
    pad_right = total_pad - pad_left
    a = _gelu_exact(x_ncl)
    y = lax.conv_general_dilated(
        a, weight,
        window_strides=(1,),
        padding=[(pad_left, pad_right)],
        rhs_dilation=(dilation,),
        dimension_numbers=("NCH", "OIH", "NCH"))
    y = y + bias[None, :, None]
    return (x_ncl + y) / math.sqrt(2.0)


if __name__ == "__main__":
    # (batch, dim, seq, K, dilation, dtype, max_rows_per_tile, atol, rtol)
    configs = [
        (2, 32, 16, 3, 2, jnp.float32, 512, 5e-5, 5e-5),   # single seq tile
        (2, 32, 32, 5, 3, jnp.float32, 8, 5e-5, 5e-5),     # 4 seq tiles w/ halos, BT=2
        (4, 64, 64, 3, 4, jnp.bfloat16, 32, 5e-2, 5e-2),   # bf16 MXU path, 2 seq tiles, BT=4
    ]

    key = jax.random.PRNGKey(0)
    for idx, (batch, dim, seq, ks, dil, dtype, max_rows, atol, rtol) in enumerate(configs):
        key, kx, kw, kb = jax.random.split(key, 4)
        fan_in = dim * ks
        bound = 1.0 / math.sqrt(fan_in)

        x32 = jax.random.normal(kx, (batch, dim, seq), dtype=jnp.float32)
        weight = jax.random.uniform(kw, (dim, dim, ks), minval=-bound,
                                    maxval=bound, dtype=jnp.float32)
        bias = jax.random.uniform(kb, (dim,), minval=-bound, maxval=bound,
                                  dtype=jnp.float32)
        x = x32.astype(dtype)

        out = gated_residual_layer(x, weight, bias, kernel_size=ks,
                                   dilation=dil, max_rows_per_tile=max_rows)
        out = jax.block_until_ready(out)

        ref = _reference(x.astype(jnp.float32), weight, bias,
                         kernel_size=ks, dilation=dil)

        assert out.shape == (batch, dim, seq), (idx, out.shape)
        ok = bool(jnp.allclose(out.astype(jnp.float32), ref,
                               atol=atol, rtol=rtol))
        err = float(jnp.max(jnp.abs(out.astype(jnp.float32) - ref)))
        assert ok, f"config {idx}: max abs err {err}"

    print("KERNEL_OK")
</pallas_src>

<mosaic_0001>
module attributes {stable_mosaic.version = 11 : i64} {
  func.func @_gated_residual_kernel(%arg0: i32, %arg1: i32, %arg2: memref<1x16x128xf32, #tpu.memory_space<vmem>>, %arg3: memref<3x128x128xf32, #tpu.memory_space<vmem>>, %arg4: memref<1x128xf32, #tpu.memory_space<vmem>>, %arg5: memref<1x16x128xf32, #tpu.memory_space<vmem>>, %arg6: memref<20x128xf32, #tpu.memory_space<vmem>>, %arg7: memref<20x128xf32, #tpu.memory_space<vmem>>) attributes {dimension_semantics = [#tpu.dimension_semantics<parallel>, #tpu.dimension_semantics<parallel>], iteration_bounds = array<i64: 2, 1>, scalar_prefetch = 0 : i64, scratch_operands = 2 : i64, tpu.core_type = #tpu.core_type<tc>, window_params = [{transform_indices = @transform_0, window_bounds = array<i64: 1, 16, 128>}, {pipeline_mode = #tpu.pipeline_mode<synchronous>, transform_indices = @transform_1, window_bounds = array<i64: 3, 128, 128>}, {pipeline_mode = #tpu.pipeline_mode<synchronous>, transform_indices = @transform_2, window_bounds = array<i64: 1, 128>}, {transform_indices = @transform_3, window_bounds = array<i64: 1, 16, 128>}]} {
    %c0 = arith.constant 0 : index
    %c0_0 = arith.constant 0 : index
    %0 = vector.load %arg4[%c0, %c0_0] : memref<1x128xf32, #tpu.memory_space<vmem>>, vector<1x128xf32>
    %c0_1 = arith.constant 0 : index
    %c0_2 = arith.constant 0 : index
    %c0_3 = arith.constant 0 : index
    %1 = vector.load %arg2[%c0_1, %c0_2, %c0_3] : memref<1x16x128xf32, #tpu.memory_space<vmem>>, vector<1x16x128xf32>
    %2 = vector.shape_cast %1 : vector<1x16x128xf32> to vector<16x128xf32>
    %cst = arith.constant 5.000000e-01 : f32
    %3 = vector.broadcast %cst : f32 to vector<16x128xf32>
    %4 = arith.mulf %2, %3 : vector<16x128xf32>
    %cst_4 = arith.constant 0.707106769 : f32
    %5 = vector.broadcast %cst_4 : f32 to vector<16x128xf32>
    %6 = arith.mulf %2, %5 : vector<16x128xf32>
    %7 = math.erf %6 : vector<16x128xf32>
    %cst_5 = arith.constant 1.000000e+00 : f32
    %8 = vector.broadcast %cst_5 : f32 to vector<16x128xf32>
    %9 = arith.addf %8, %7 : vector<16x128xf32>
    %10 = arith.mulf %4, %9 : vector<16x128xf32>
    %c2 = arith.constant 2 : index
    %c0_6 = arith.constant 0 : index
    %11 = vector.load %arg6[%c2, %c0_6] : memref<20x128xf32, #tpu.memory_space<vmem>>, vector<16x128xf32>
    tpu.vector_store %arg6[%c2, %c0_6], %10 {strides = array<i32>} : memref<20x128xf32, #tpu.memory_space<vmem>>, vector<16x128xf32>,
    %12 = vector.broadcast %0 : vector<1x128xf32> to vector<16x128xf32>
    %13 = arith.addf %2, %12 : vector<16x128xf32>
    %c0_7 = arith.constant 0 : index
    %c0_8 = arith.constant 0 : index
    %14 = vector.load %arg7[%c0_7, %c0_8] : memref<20x128xf32, #tpu.memory_space<vmem>>, vector<16x128xf32>
    tpu.vector_store %arg7[%c0_7, %c0_8], %13 {strides = array<i32>} : memref<20x128xf32, #tpu.memory_space<vmem>>, vector<16x128xf32>,
    %cst_9 = arith.constant 0.000000e+00 : f32
    %15 = vector.broadcast %cst_9 : f32 to vector<4x128xf32>
    %c16 = arith.constant 16 : index
    %c0_10 = arith.constant 0 : index
    %16 = vector.load %arg7[%c16, %c0_10] : memref<20x128xf32, #tpu.memory_space<vmem>>, vector<4x128xf32>
    tpu.vector_store %arg7[%c16, %c0_10], %15 {strides = array<i32>} : memref<20x128xf32, #tpu.memory_space<vmem>>, vector<4x128xf32>,
    %cst_11 = arith.constant 0.000000e+00 : f32
    %17 = vector.broadcast %cst_11 : f32 to vector<2x128xf32>
    %c0_12 = arith.constant 0 : index
    %c0_13 = arith.constant 0 : index
    %18 = vector.load %arg6[%c0_12, %c0_13] : memref<20x128xf32, #tpu.memory_space<vmem>>, vector<2x128xf32>
    tpu.vector_store %arg6[%c0_12, %c0_13], %17 {strides = array<i32>} : memref<20x128xf32, #tpu.memory_space<vmem>>, vector<2x128xf32>,
    %cst_14 = arith.constant 0.000000e+00 : f32
    %19 = vector.broadcast %cst_14 : f32 to vector<2x128xf32>
    %c18 = arith.constant 18 : index
    %c0_15 = arith.constant 0 : index
    %20 = vector.load %arg6[%c18, %c0_15] : memref<20x128xf32, #tpu.memory_space<vmem>>, vector<2x128xf32>
    tpu.vector_store %arg6[%c18, %c0_15], %19 {strides = array<i32>} : memref<20x128xf32, #tpu.memory_space<vmem>>, vector<2x128xf32>,
    %c0_16 = arith.constant 0 : index
    %c0_17 = arith.constant 0 : index
    %21 = vector.load %arg6[%c0_16, %c0_17] : memref<20x128xf32, #tpu.memory_space<vmem>>, vector<16x128xf32>
    %c0_18 = arith.constant 0 : index
    %c0_19 = arith.constant 0 : index
    %22 = vector.load %arg7[%c0_18, %c0_19] : memref<20x128xf32, #tpu.memory_space<vmem>>, vector<16x128xf32>
    %c0_20 = arith.constant 0 : index
    %c0_21 = arith.constant 0 : index
    %c0_22 = arith.constant 0 : index
    %23 = vector.load %arg3[%c0_20, %c0_21, %c0_22] : memref<3x128x128xf32, #tpu.memory_space<vmem>>, vector<1x128x128xf32>
    %24 = vector.shape_cast %23 : vector<1x128x128xf32> to vector<128x128xf32>
    %cst_23 = arith.constant dense<0.000000e+00> : vector<16x128xf32>
    %25 = tpu.matmul %21, %24, %cst_23 {dimension_numbers = #tpu.dot_dimension_numbers<[1], [0], [0], [1], [0, 0, 1, 1], [], []>} : vector<16x128xf32>, vector<128x128xf32>, vector<16x128xf32> -> vector<16x128xf32>
    %26 = arith.addf %22, %25 : vector<16x128xf32>
    %c0_24 = arith.constant 0 : index
    %c0_25 = arith.constant 0 : index
    %27 = vector.load %arg7[%c0_24, %c0_25] : memref<20x128xf32, #tpu.memory_space<vmem>>, vector<16x128xf32>
    tpu.vector_store %arg7[%c0_24, %c0_25], %26 {strides = array<i32>} : memref<20x128xf32, #tpu.memory_space<vmem>>, vector<16x128xf32>,
    %c2_26 = arith.constant 2 : index
    %c0_27 = arith.constant 0 : index
    %28 = vector.load %arg6[%c2_26, %c0_27] : memref<20x128xf32, #tpu.memory_space<vmem>>, vector<16x128xf32>
    %c0_28 = arith.constant 0 : index
    %c0_29 = arith.constant 0 : index
    %29 = vector.load %arg7[%c0_28, %c0_29] : memref<20x128xf32, #tpu.memory_space<vmem>>, vector<16x128xf32>
    %c1 = arith.constant 1 : index
    %c0_30 = arith.constant 0 : index
    %c0_31 = arith.constant 0 : index
    %30 = vector.load %arg3[%c1, %c0_30, %c0_31] : memref<3x128x128xf32, #tpu.memory_space<vmem>>, vector<1x128x128xf32>
    %31 = vector.shape_cast %30 : vector<1x128x128xf32> to vector<128x128xf32>
    %cst_32 = arith.constant dense<0.000000e+00> : vector<16x128xf32>
    %32 = tpu.matmul %28, %31, %cst_32 {dimension_numbers = #tpu.dot_dimension_numbers<[1], [0], [0], [1], [0, 0, 1, 1], [], []>} : vector<16x128xf32>, vector<128x128xf32>, vector<16x128xf32> -> vector<16x128xf32>
    %33 = arith.addf %29, %32 : vector<16x128xf32>
    %c0_33 = arith.constant 0 : index
    %c0_34 = arith.constant 0 : index
    %34 = vector.load %arg7[%c0_33, %c0_34] : memref<20x128xf32, #tpu.memory_space<vmem>>, vector<16x128xf32>
    tpu.vector_store %arg7[%c0_33, %c0_34], %33 {strides = array<i32>} : memref<20x128xf32, #tpu.memory_space<vmem>>, vector<16x128xf32>,
    %c4 = arith.constant 4 : index
    %c0_35 = arith.constant 0 : index
    %35 = vector.load %arg6[%c4, %c0_35] : memref<20x128xf32, #tpu.memory_space<vmem>>, vector<16x128xf32>
    %c0_36 = arith.constant 0 : index
    %c0_37 = arith.constant 0 : index
    %36 = vector.load %arg7[%c0_36, %c0_37] : memref<20x128xf32, #tpu.memory_space<vmem>>, vector<16x128xf32>
    %c2_38 = arith.constant 2 : index
    %c0_39 = arith.constant 0 : index
    %c0_40 = arith.constant 0 : index
    %37 = vector.load %arg3[%c2_38, %c0_39, %c0_40] : memref<3x128x128xf32, #tpu.memory_space<vmem>>, vector<1x128x128xf32>
    %38 = vector.shape_cast %37 : vector<1x128x128xf32> to vector<128x128xf32>
    %cst_41 = arith.constant dense<0.000000e+00> : vector<16x128xf32>
    %39 = tpu.matmul %35, %38, %cst_41 {dimension_numbers = #tpu.dot_dimension_numbers<[1], [0], [0], [1], [0, 0, 1, 1], [], []>} : vector<16x128xf32>, vector<128x128xf32>, vector<16x128xf32> -> vector<16x128xf32>
    %40 = arith.addf %36, %39 : vector<16x128xf32>
    %c0_42 = arith.constant 0 : index
    %c0_43 = arith.constant 0 : index
    %41 = vector.load %arg7[%c0_42, %c0_43] : memref<20x128xf32, #tpu.memory_space<vmem>>, vector<16x128xf32>
    tpu.vector_store %arg7[%c0_42, %c0_43], %40 {strides = array<i32>} : memref<20x128xf32, #tpu.memory_space<vmem>>, vector<16x128xf32>,
    %c0_44 = arith.constant 0 : index
    %c0_45 = arith.constant 0 : index
    %42 = vector.load %arg7[%c0_44, %c0_45] : memref<20x128xf32, #tpu.memory_space<vmem>>, vector<16x128xf32>
    %cst_46 = arith.constant 0.707106769 : f32
    %43 = vector.broadcast %cst_46 : f32 to vector<16x128xf32>
    %44 = arith.mulf %42, %43 : vector<16x128xf32>
    %c0_47 = arith.constant 0 : index
    %c0_48 = arith.constant 0 : index
    %c0_49 = arith.constant 0 : index
    %45 = vector.load %arg5[%c0_47, %c0_48, %c0_49] : memref<1x16x128xf32, #tpu.memory_space<vmem>>, vector<1x16x128xf32>
    %46 = vector.shape_cast %45 : vector<1x16x128xf32> to vector<16x128xf32>
    %47 = vector.shape_cast %44 : vector<16x128xf32> to vector<1x16x128xf32>
    tpu.vector_store %arg5[%c0_47, %c0_48, %c0_49], %47 {strides = array<i32>} : memref<1x16x128xf32, #tpu.memory_space<vmem>>, vector<1x16x128xf32>,
    return
  }
  func.func @transform_0(%arg0: i32, %arg1: i32) -> (i32, i32, i32) {
    %c0_i32 = arith.constant 0 : i32
    %c0_i32_0 = arith.constant 0 : i32
    return %arg0, %arg1, %c0_i32 : i32, i32, i32
  }
  func.func @transform_1(%arg0: i32, %arg1: i32) -> (i32, i32, i32) {
    %c0_i32 = arith.constant 0 : i32
    %c0_i32_0 = arith.constant 0 : i32
    %c0_i32_1 = arith.constant 0 : i32
    %c0_i32_2 = arith.constant 0 : i32
    return %c0_i32, %c0_i32_0, %c0_i32_1 : i32, i32, i32
  }
  func.func @transform_2(%arg0: i32, %arg1: i32) -> (i32, i32) {
    %c0_i32 = arith.constant 0 : i32
    %c0_i32_0 = arith.constant 0 : i32
    %c0_i32_1 = arith.constant 0 : i32
    return %c0_i32, %c0_i32_0 : i32, i32
  }
  func.func @transform_3(%arg0: i32, %arg1: i32) -> (i32, i32, i32) {
    %c0_i32 = arith.constant 0 : i32
    %c0_i32_0 = arith.constant 0 : i32
    return %arg0, %arg1, %c0_i32 : i32, i32, i32
  }
}

</mosaic_0001>

<llo_original>
// kernel: tpu_custom_call.1
$region0: #{tpu_custom_call.1}
  #allocation0 [shape = 'u32[]', space=smem, size = 0x4, offset = 0x4, fixed_abs, tag = 'smem constant byte address 0x4 - core index']
  #allocation1 [shape = 'u32[144,128]{1,0:T(1,128)}', space=vmem, size = 0x12000, scoped, tag = 'internal scratch']
  #allocation2 [shape = 'f32[20,128]{1,0:T(8,128)}', space=vmem, size = 0x3000, scoped, tag = 'scratch operand']
  #allocation3 [shape = 'f32[20,128]{1,0:T(8,128)}', space=vmem, size = 0x3000, scoped, tag = 'scratch operand']
  %s0 = inlined_call_operand.hbm [shape: f32[2,16,128], index: 0, kind: input, shape index: {}]
  %s1 = inlined_call_operand.hbm [shape: f32[3,128,128], index: 1, kind: input, shape index: {}]
  %s2 = inlined_call_operand.vmem [shape: f32[1,128], index: 2, kind: input, shape index: {}]
  %s3 = inlined_call_operand.hbm [shape: f32[2,16,128], index: 3, kind: output, shape index: {}]
  %s4 = sld [smem:[#allocation0]]
  $region53: #{tpu_custom_call.1} parent=0
    _
  %s6 = ssub.s32 1, %s4
  %s7 = scalar_select 0, %s6, %s4
  $region1: #{tpu_custom_call.1} parent=0
    #allocation4 [shape = 'u8[16384]{0}', space=vmem, size = 0x4000, scoped, tag = 'input window, operand 0']
    #allocation5 [shape = 's32[2]{0}', space=sflag, size = 0x8, scoped, tag = 'scoped memory for tpu_custom_call.1']
    #allocation6 [shape = 's32[2]{0}', space=sflag, size = 0x8, scoped, tag = 'scoped memory for tpu_custom_call.1']
    #allocation7 [shape = 'u8[196608]{0}', space=vmem, size = 0x30000, scoped, tag = 'input window, operand 1, single buffered']
    #allocation8 [shape = 's32[1]{0}', space=sflag, size = 0x4, scoped, tag = 'scoped memory for tpu_custom_call.1']
    #allocation9 [shape = 'u8[16384]{0}', space=vmem, size = 0x4000, scoped, tag = 'output window, operand 0']
    %8 = vsyncpa [#allocation5], 0
    %s9 = scalar_lea.sflag [#allocation5], 1
    %10 = vsyncpa %s9, 0
    %11 = vsyncpa [#allocation8], 0
    %12 = vsyncpa [#allocation6], 0
    %s13 = scalar_lea.sflag [#allocation6], 1
    %14 = vsyncpa %s13, 0
    loop: start=0, step=1, limit=4
    $region2: #{tpu_custom_call.1} parent=1 // loop_pre_header
      _
    $region3: #{tpu_custom_call.1} parent=1 // loop_header
      %s16 = sphi 0, %s20
      %p17 = scmp.ge.s32.totalorder %s16, 4
      %s23 = sphi 0, %s35
      %s24 = sphi 0, %s31
      %s25 = sphi 0, %s23
      %s26 = sphi 0, %s24
      %s27 = sphi 0, %s25
      %s28 = sphi 0, %s26
      %s40 = sphi 0, %s42
      %s43 = sphi 0, %s40
      %s44 = sphi 0, %s43
      %s60 = sphi 0, %s44
      %s64 = sphi 0, %s64
      %s66 = sphi 0, %s64
      %s67 = sphi 0, %s66
      %s81 = sphi 0, %s67
      %s85 = sphi 0, %s85
      %s87 = sphi 0, %s85
      %s88 = sphi 0, %s87
      %s102 = sphi 0, %s88
      %s110 = sphi 0, %s112
      %s113 = sphi 0, %s110
      %s114 = sphi 0, %s113
      %s130 = sphi 0, %s114
    $region4: #{tpu_custom_call.1} parent=1 // loop_header_branch
      %19 = sbr.rel (%p17) target = $region8
    $region5: #{tpu_custom_call.1} parent=1 // loop_body
      %s21 = ssub.s32 %s16, 1
      %s22 = ssub.s32 %s16, 2
      %s29 = sadd.s32 1, %s24
      %p30 = scmp.ge.s32.totalorder %s29, 1
      %s31 = scalar_select %p30, 0, %s29
      %s32 = sadd.s32 1, %s23
      %s33 = scalar_select %p30, %s32, %s23
      %p34 = scmp.ge.s32.totalorder %s33, 2
      %s35 = scalar_select %p34, 0, %s33
      %s36 = ssub.s32 %s23, %s35
      %s37 = ssub.s32 %s24, %s31
      %s38 = sor.u32 %s36, %s37
      %p39 = scmp.eq.s32.totalorder %s38, 0
      %s41 = sadd.s32 %s40, 1
      %s42 = scalar_select %p39, %s40, %s41
      %p45 = pneg %p39
      %p46 = scmp.eq.s32.totalorder %s16, 1
      %p47 = por %p45, %p46
      %p48 = scmp.ne.s32.totalorder %s40, %s43
      %p49 = scmp.eq.s32.totalorder %s16, 0
      %p50 = por %p48, %p49
      %p51 = scmp.ne.s32.totalorder %s40, %s43
      %p52 = scmp.eq.s32.totalorder %s21, 1
      %p53 = por %p51, %p52
      %p54 = scmp.ne.s32.totalorder %s43, %s44
      %p55 = scmp.eq.s32.totalorder %s21, 0
      %p56 = por %p54, %p55
      %p57 = scmp.ne.s32.totalorder %s43, %s44
      %p58 = scmp.eq.s32.totalorder %s22, 1
      %p59 = por %p57, %p58
      %p61 = scmp.ne.s32.totalorder %s44, %s60
      %p62 = scmp.eq.s32.totalorder %s22, 0
      %p63 = por %p61, %p62
      %s65 = sadd.s32 %s64, 1
      %p68 = scmp.eq.s32.totalorder %s16, 1
      %p69 = scmp.ne.s32.totalorder %s64, %s66
      %p70 = scmp.eq.s32.totalorder %s16, 0
      %p71 = por %p69, %p70
      %p72 = scmp.ne.s32.totalorder %s64, %s66
      %p73 = scmp.eq.s32.totalorder %s21, 1
      %p74 = por %p72, %p73
      %p75 = scmp.ne.s32.totalorder %s66, %s67
      %p76 = scmp.eq.s32.totalorder %s21, 0
      %p77 = por %p75, %p76
      %p78 = scmp.ne.s32.totalorder %s66, %s67
      %p79 = scmp.eq.s32.totalorder %s22, 1
      %p80 = por %p78, %p79
      %p82 = scmp.ne.s32.totalorder %s67, %s81
      %p83 = scmp.eq.s32.totalorder %s22, 0
      %p84 = por %p82, %p83
      %s86 = sadd.s32 %s85, 1
      %p89 = scmp.eq.s32.totalorder %s16, 1
      %p90 = scmp.ne.s32.totalorder %s85, %s87
      %p91 = scmp.eq.s32.totalorder %s16, 0
      %p92 = por %p90, %p91
      %p93 = scmp.ne.s32.totalorder %s85, %s87
      %p94 = scmp.eq.s32.totalorder %s21, 1
      %p95 = por %p93, %p94
      %p96 = scmp.ne.s32.totalorder %s87, %s88
      %p97 = scmp.eq.s32.totalorder %s21, 0
      %p98 = por %p96, %p97
      %p99 = scmp.ne.s32.totalorder %s87, %s88
      %p100 = scmp.eq.s32.totalorder %s22, 1
      %p101 = por %p99, %p100
      %p103 = scmp.ne.s32.totalorder %s88, %s102
      %p104 = scmp.eq.s32.totalorder %s22, 0
      %p105 = por %p103, %p104
      %s106 = ssub.s32 %s23, %s35
      %s107 = ssub.s32 %s24, %s31
      %s108 = sor.u32 %s106, %s107
      %p109 = scmp.eq.s32.totalorder %s108, 0
      %s111 = sadd.s32 %s110, 1
      %s112 = scalar_select %p109, %s110, %s111
      %p115 = pneg %p109
      %p116 = scmp.eq.s32.totalorder %s16, 1
      %p117 = por %p115, %p116
      %p118 = scmp.ne.s32.totalorder %s110, %s113
      %p119 = scmp.eq.s32.totalorder %s16, 0
      %p120 = por %p118, %p119
      %p121 = scmp.ne.s32.totalorder %s110, %s113
      %p122 = scmp.eq.s32.totalorder %s21, 1
      %p123 = por %p121, %p122
      %p124 = scmp.ne.s32.totalorder %s113, %s114
      %p125 = scmp.eq.s32.totalorder %s21, 0
      %p126 = por %p124, %p125
      %p127 = scmp.ne.s32.totalorder %s113, %s114
      %p128 = scmp.eq.s32.totalorder %s22, 1
      %p129 = por %p127, %p128
      %p131 = scmp.ne.s32.totalorder %s114, %s130
      %p132 = scmp.eq.s32.totalorder %s22, 0
      %p133 = por %p131, %p132
      %p134 = scmp.le.s32.totalorder 1, %s16
      %p135 = scmp.lt.s32.totalorder %s16, 3
      %p136 = pnand %p134, %p135
      %p137 = pneg %p136
      // Predicated region
      $region9: #{tpu_custom_call.1} parent=5 // pred_check
        _
      $region10: #{tpu_custom_call.1} parent=5 // pred_check_branch
        %139 = sbr.rel (%p136) target = $region12
      $region11: #{tpu_custom_call.1} parent=5 // pred_region
        %s140 = ssub.s32 %s16, 1
        // Predicated region
        $region13: #{tpu_custom_call.1} parent=11 // pred_check
          %p141 = pneg %p77
        $region14: #{tpu_custom_call.1} parent=11 // pred_check_branch
          %143 = sbr.rel (%p141) target = $region16
        $region15: #{tpu_custom_call.1} parent=11 // pred_region
          %s145 = ssub.s32 6144, 6144
          %146 = vsyncadd [#allocation8], %s145
          %s147 = sshll.u32 [#allocation7], 4
          %s148 = int_to_ptr.vmem [resolvable:$true] %s147
          %153 = dma.hbm_to_vmem [thread:$0]  %s1, 6144, %s148, [#allocation8], 128, 128, 8
        $region16: #{tpu_custom_call.1} parent=11 // pred_fallthru
          _
        // Predicated region
        $region17: #{tpu_custom_call.1} parent=11 // pred_check
          %p154 = pneg %p98
        $region18: #{tpu_custom_call.1} parent=11 // pred_check_branch
          %156 = sbr.rel (%p154) target = $region20
        $region19: #{tpu_custom_call.1} parent=11 // pred_region
          _
        $region20: #{tpu_custom_call.1} parent=11 // pred_fallthru
          _
      $region12: #{tpu_custom_call.1} parent=5 // pred_fallthru
        _
      %p157 = scmp.lt.s32.totalorder %s16, 2
      // Predicated region
      $region21: #{tpu_custom_call.1} parent=5 // pred_check
        %p158 = pneg %p157
      $region22: #{tpu_custom_call.1} parent=5 // pred_check_branch
        %160 = sbr.rel (%p158) target = $region24
      $region23: #{tpu_custom_call.1} parent=5 // pred_region
        // Predicated region
        $region25: #{tpu_custom_call.1} parent=23 // pred_check
          %p161 = pneg %p50
        $region26: #{tpu_custom_call.1} parent=23 // pred_check_branch
          %163 = sbr.rel (%p161) target = $region28
        $region27: #{tpu_custom_call.1} parent=23 // pred_region
          %s164 = sand.u32 %s40, 1
          %s165 = scalar_lea.sflag [#allocation5], %s164
          %s166 = sand.u32 %s40, 1
          %s167 = smul.addr %s166, 16
          %s168 = scalar_lea.vmem [#allocation4], %s167
          %s169 = smul.u32 2, %s24
          %s171 = ssub.s32 256, 256
          %172 = vsyncadd %s165, %s171
          %s173 = smul.addr %s23, 2
          %s174 = sadd.s32 %s169, %s173
          %s175 = smul.addr %s174, 128
          %s176 = scalar_lea.hbm %s0, %s175
          %s177 = sshll.u32 %s168, 4
          %s178 = int_to_ptr.vmem [resolvable:$true] %s177
          %183 = dma.hbm_to_vmem [thread:$0]  %s176, 256, %s178, %s165, 128, 128, 8
        $region28: #{tpu_custom_call.1} parent=23 // pred_fallthru
          _
      $region24: #{tpu_custom_call.1} parent=5 // pred_fallthru
        _
      %p184 = scmp.le.s32.totalorder 1, %s16
      %p185 = scmp.lt.s32.totalorder %s16, 3
      %p186 = pnand %p184, %p185
      %p187 = pneg %p186
      // Predicated region
      $region29: #{tpu_custom_call.1} parent=5 // pred_check
        _
      $region30: #{tpu_custom_call.1} parent=5 // pred_check_branch
        %189 = sbr.rel (%p186) target = $region32
      $region31: #{tpu_custom_call.1} parent=5 // pred_region
        %s190 = ssub.s32 %s16, 1
        %s191 = sand.u32 %s43, 1
        %s192 = scalar_lea.sflag [#allocation5], %s191
        %s193 = sand.u32 %s43, 1
        %s194 = smul.addr %s193, 16
        %s195 = scalar_lea.vmem [#allocation4], %s194
        // Predicated region
        $region33: #{tpu_custom_call.1} parent=31 // pred_check
          %p196 = pneg %p56
        $region34: #{tpu_custom_call.1} parent=31 // pred_check_branch
          %198 = sbr.rel (%p196) target = $region36
        $region35: #{tpu_custom_call.1} parent=31 // pred_region
          %199 = dma.done %s192, 256
        $region36: #{tpu_custom_call.1} parent=31 // pred_fallthru
          _
        // Predicated region
        $region37: #{tpu_custom_call.1} parent=31 // pred_check
          %p200 = pneg %p77
        $region38: #{tpu_custom_call.1} parent=31 // pred_check_branch
          %202 = sbr.rel (%p200) target = $region40
        $region39: #{tpu_custom_call.1} parent=31 // pred_region
          %203 = dma.done [#allocation8], 6144
        $region40: #{tpu_custom_call.1} parent=31 // pred_fallthru
          _
        %s204 = sand.u32 %s43, 1
        %s205 = scalar_lea.sflag [#allocation5], %s204
        %s206 = sand.u32 %s43, 1
        %s207 = smul.addr %s206, 16
        %s208 = scalar_lea.vmem [#allocation4], %s207
        %p209 = pneg %p56
        %p210 = pneg %p53
        %p211 = pneg %p77
        %p212 = pneg %p74
        %p213 = pneg %p98
        %p214 = pneg %p95
        %p215 = pneg %p126
        %p216 = pneg %p123
        %s217 = sand.u32 %s113, 1
        %s218 = scalar_lea.sflag [#allocation6], %s217
        %s219 = sand.u32 %s113, 1
        %s220 = smul.addr %s219, 16
        %s221 = scalar_lea.vmem [#allocation9], %s220
        %s222 = smul.u32 2, %s26
        %s223 = smul.u32 2, %s26
        %v224 = vld [vmem:[%s2] sm:$0x1]
        %v225 = vld [vmem:[%s195] sm:$0xff]
        %v226 = vld [vmem:[%s195 + $0x8] sm:$0xff]
        %v227 = vmul.f32 %v225, 0.5
        %v228 = vmul.f32 %v226, 0.5
        %v229 = vmul.f32 %v225, 0.70710677
        %v230 = vmul.f32 %v226, 0.70710677
        %v231 = verf.f32.pop %v229
        %v232 = verf.f32.pop %v230
        %v233 = vadd.f32 %v231, 1.0
        %v234 = vadd.f32 %v232, 1.0
        %v235 = vmul.f32 %v227, %v233
        %v236 = vmul.f32 %v228, %v234
        %237 = vst [vmem:[#allocation2 + $0x2] sm:$0xff] %v235
        %238 = vst [vmem:[#allocation2 + $0xa] sm:$0xff] %v236
        %v240 = vlaneseq
        %v241 = vshrl.u32 %v240, 7
        %v242 = vsub.s32 0, %v241
        %v243 = vrot.slane %v224, %v242
        %v245 = vadd.f32 %v225, %v243
        %v246 = vadd.f32 %v226, %v243
        %247 = vst [vmem:[#allocation3] sm:$0xff] %v245
        %248 = vst [vmem:[#allocation3 + $0x8] sm:$0xff] %v246
        %249 = vst [vmem:[#allocation3 + $0x10] sm:$0xf] 0.0
        %250 = vst [vmem:[#allocation2] sm:$0x3] 0.0
        %251 = vst [vmem:[#allocation2 + $0x12] sm:$0x3] 0.0
        %v252 = vld [vmem:[#allocation2] sm:$0xff]
        %v253 = vld [vmem:[#allocation2 + $0x8] sm:$0xff]
        %v254 = vld [vmem:[#allocation3] sm:$0xff]
        %v255 = vld [vmem:[#allocation3 + $0x8] sm:$0xff]
        %v256 = vld [vmem:[#allocation7] sm:$0xff]
        %v257 = vld [vmem:[#allocation7 + $0x8] sm:$0xff]
        %v258 = vld [vmem:[#allocation7 + $0x10] sm:$0xff]
        %v259 = vld [vmem:[#allocation7 + $0x18] sm:$0xff]
        %v260 = vld [vmem:[#allocation7 + $0x20] sm:$0xff]
        %v261 = vld [vmem:[#allocation7 + $0x28] sm:$0xff]
        %v262 = vld [vmem:[#allocation7 + $0x30] sm:$0xff]
        %v263 = vld [vmem:[#allocation7 + $0x38] sm:$0xff]
        %v264 = vld [vmem:[#allocation7 + $0x40] sm:$0xff]
        %v265 = vld [vmem:[#allocation7 + $0x48] sm:$0xff]
        %v266 = vld [vmem:[#allocation7 + $0x50] sm:$0xff]
        %v267 = vld [vmem:[#allocation7 + $0x58] sm:$0xff]
        %v268 = vld [vmem:[#allocation7 + $0x60] sm:$0xff]
        %v269 = vld [vmem:[#allocation7 + $0x68] sm:$0xff]
        %v270 = vld [vmem:[#allocation7 + $0x70] sm:$0xff]
        %v271 = vld [vmem:[#allocation7 + $0x78] sm:$0xff]
        %272 = vmatprep.subr.mxu0 0.0
        %273 = vmatpush1.msra.mxu0 %v271
        %274 = vmatprep.subr.mxu0 0.0
        %275 = vmatpush1.msra.mxu0 %v270
        %276 = vmatprep.subr.mxu0 0.0
        %277 = vmatpush1.msra.mxu0 %v269
        %278 = vmatprep.subr.mxu0 0.0
        %279 = vmatpush1.msra.mxu0 %v268
        %280 = vmatprep.subr.mxu0 0.0
        %281 = vmatpush1.msra.mxu0 %v267
        %282 = vmatprep.subr.mxu0 0.0
        %283 = vmatpush1.msra.mxu0 %v266
        %284 = vmatprep.subr.mxu0 0.0
        %285 = vmatpush1.msra.mxu0 %v265
        %286 = vmatprep.subr.mxu0 0.0
        %287 = vmatpush1.msra.mxu0 %v264
        %288 = vmatprep.subr.mxu0 0.0
        %289 = vmatpush1.msra.mxu0 %v263
        %290 = vmatprep.subr.mxu0 0.0
        %291 = vmatpush1.msra.mxu0 %v262
        %292 = vmatprep.subr.mxu0 0.0
        %293 = vmatpush1.msra.mxu0 %v261
        %294 = vmatprep.subr.mxu0 0.0
        %295 = vmatpush1.msra.mxu0 %v260
        %296 = vmatprep.subr.mxu0 0.0
        %297 = vmatpush1.msra.mxu0 %v259
        %298 = vmatprep.subr.mxu0 0.0
        %299 = vmatpush1.msra.mxu0 %v258
        %300 = vmatprep.subr.mxu0 0.0
        %301 = vmatpush1.msra.mxu0 %v257
        %302 = vmatprep.subr.mxu0 0.0
        %303 = vmatpush1.msra.mxu0 %v256
        %304 = vmatprep.subr.mxu0 0.0
        %305 = vmatpush2.msra.mxu0 0.0
        %306 = vmatprep.subr.mxu0 0.0
        %307 = vmatpush2.msra.mxu0 0.0
        %308 = vmatprep.subr.mxu0 0.0
        %309 = vmatpush2.msra.mxu0 0.0
        %310 = vmatprep.subr.mxu0 0.0
        %311 = vmatpush2.msra.mxu0 0.0
        %312 = vmatprep.subr.mxu0 0.0
        %313 = vmatpush2.msra.mxu0 0.0
        %314 = vmatprep.subr.mxu0 0.0
        %315 = vmatpush2.msra.mxu0 0.0
        %316 = vmatprep.subr.mxu0 0.0
        %317 = vmatpush2.msra.mxu0 0.0
        %318 = vmatprep.subr.mxu0 0.0
        %319 = vmatpush2.msra.mxu0 0.0
        %320 = vmatprep.subr.mxu0 0.0
        %321 = vmatpush2.msra.mxu0 0.0
        %322 = vmatprep.subr.mxu0 0.0
        %323 = vmatpush2.msra.mxu0 0.0
        %324 = vmatprep.subr.mxu0 0.0
        %325 = vmatpush2.msra.mxu0 0.0
        %326 = vmatprep.subr.mxu0 0.0
        %327 = vmatpush2.msra.mxu0 0.0
        %328 = vmatprep.subr.mxu0 0.0
        %329 = vmatpush2.msra.mxu0 0.0
        %330 = vmatprep.subr.mxu0 0.0
        %331 = vmatpush2.msra.mxu0 0.0
        %332 = vmatprep.subr.mxu0 0.0
        %333 = vmatpush2.msra.mxu0 0.0
        %334 = vmatprep.subr.mxu0 0.0
        %335 = vmatpush2.msra.mxu0 0.0
        %336 = vmatprep.mubr.f32.mxu0 0.0
        %337 = vmatmul.mubr.f32.gmra.mxu0 %v252
        %v338 = vpop.f32.mrf.mxu0
        %v339 = vadd.f32 0.0, %v338
        %v340 = vpop.f32.mrf.mxu0
        %341 = vmatprep.mubr.f32.mxu0 0.0
        %342 = vmatmul.mubr.f32.gmra.mxu0 %v253
        %v343 = vpop.f32.mrf.mxu0
        %v344 = vadd.f32 0.0, %v343
        %v345 = vpop.f32.mrf.mxu0
        %346 = vdwg.mxu0
        %v347 = vadd.f32 %v254, %v339
        %v348 = vadd.f32 %v255, %v344
        %349 = vst [vmem:[#allocation3] sm:$0xff] %v347
        %350 = vst [vmem:[#allocation3 + $0x8] sm:$0xff] %v348
        %v351 = vld [vmem:[#allocation2 + $0x2] sm:$0xff]
        %v352 = vld [vmem:[#allocation2 + $0xa] sm:$0xff]
        %v353 = vld [vmem:[#allocation3] sm:$0xff]
        %v354 = vld [vmem:[#allocation3 + $0x8] sm:$0xff]
        %s355 = scalar_lea.vmem [#allocation7], 128
        %v356 = vld [vmem:[%s355] sm:$0xff]
        %v357 = vld [vmem:[%s355 + $0x8] sm:$0xff]
        %v358 = vld [vmem:[%s355 + $0x10] sm:$0xff]
        %v359 = vld [vmem:[%s355 + $0x18] sm:$0xff]
        %v360 = vld [vmem:[%s355 + $0x20] sm:$0xff]
        %v361 = vld [vmem:[%s355 + $0x28] sm:$0xff]
        %v362 = vld [vmem:[%s355 + $0x30] sm:$0xff]
        %v363 = vld [vmem:[%s355 + $0x38] sm:$0xff]
        %v364 = vld [vmem:[%s355 + $0x40] sm:$0xff]
        %v365 = vld [vmem:[%s355 + $0x48] sm:$0xff]
        %v366 = vld [vmem:[%s355 + $0x50] sm:$0xff]
        %v367 = vld [vmem:[%s355 + $0x58] sm:$0xff]
        %v368 = vld [vmem:[%s355 + $0x60] sm:$0xff]
        %v369 = vld [vmem:[%s355 + $0x68] sm:$0xff]
        %v370 = vld [vmem:[%s355 + $0x70] sm:$0xff]
        %v371 = vld [vmem:[%s355 + $0x78] sm:$0xff]
        %372 = vmatprep.subr.mxu0 0.0
        %373 = vmatpush1.msra.mxu0 %v371
        %374 = vmatprep.subr.mxu0 0.0
        %375 = vmatpush1.msra.mxu0 %v370
        %376 = vmatprep.subr.mxu0 0.0
        %377 = vmatpush1.msra.mxu0 %v369
        %378 = vmatprep.subr.mxu0 0.0
        %379 = vmatpush1.msra.mxu0 %v368
        %380 = vmatprep.subr.mxu0 0.0
        %381 = vmatpush1.msra.mxu0 %v367
        %382 = vmatprep.subr.mxu0 0.0
        %383 = vmatpush1.msra.mxu0 %v366
        %384 = vmatprep.subr.mxu0 0.0
        %385 = vmatpush1.msra.mxu0 %v365
        %386 = vmatprep.subr.mxu0 0.0
        %387 = vmatpush1.msra.mxu0 %v364
        %388 = vmatprep.subr.mxu0 0.0
        %389 = vmatpush1.msra.mxu0 %v363
        %390 = vmatprep.subr.mxu0 0.0
        %391 = vmatpush1.msra.mxu0 %v362
        %392 = vmatprep.subr.mxu0 0.0
        %393 = vmatpush1.msra.mxu0 %v361
        %394 = vmatprep.subr.mxu0 0.0
        %395 = vmatpush1.msra.mxu0 %v360
        %396 = vmatprep.subr.mxu0 0.0
        %397 = vmatpush1.msra.mxu0 %v359
        %398 = vmatprep.subr.mxu0 0.0
        %399 = vmatpush1.msra.mxu0 %v358
        %400 = vmatprep.subr.mxu0 0.0
        %401 = vmatpush1.msra.mxu0 %v357
        %402 = vmatprep.subr.mxu0 0.0
        %403 = vmatpush1.msra.mxu0 %v356
        %404 = vmatprep.subr.mxu0 0.0
        %405 = vmatpush2.msra.mxu0 0.0
        %406 = vmatprep.subr.mxu0 0.0
        %407 = vmatpush2.msra.mxu0 0.0
        %408 = vmatprep.subr.mxu0 0.0
        %409 = vmatpush2.msra.mxu0 0.0
        %410 = vmatprep.subr.mxu0 0.0
        %411 = vmatpush2.msra.mxu0 0.0
        %412 = vmatprep.subr.mxu0 0.0
        %413 = vmatpush2.msra.mxu0 0.0
        %414 = vmatprep.subr.mxu0 0.0
        %415 = vmatpush2.msra.mxu0 0.0
        %416 = vmatprep.subr.mxu0 0.0
        %417 = vmatpush2.msra.mxu0 0.0
        %418 = vmatprep.subr.mxu0 0.0
        %419 = vmatpush2.msra.mxu0 0.0
        %420 = vmatprep.subr.mxu0 0.0
        %421 = vmatpush2.msra.mxu0 0.0
        %422 = vmatprep.subr.mxu0 0.0
        %423 = vmatpush2.msra.mxu0 0.0
        %424 = vmatprep.subr.mxu0 0.0
        %425 = vmatpush2.msra.mxu0 0.0
        %426 = vmatprep.subr.mxu0 0.0
        %427 = vmatpush2.msra.mxu0 0.0
        %428 = vmatprep.subr.mxu0 0.0
        %429 = vmatpush2.msra.mxu0 0.0
        %430 = vmatprep.subr.mxu0 0.0
        %431 = vmatpush2.msra.mxu0 0.0
        %432 = vmatprep.subr.mxu0 0.0
        %433 = vmatpush2.msra.mxu0 0.0
        %434 = vmatprep.subr.mxu0 0.0
        %435 = vmatpush2.msra.mxu0 0.0
        %436 = vmatprep.mubr.f32.mxu0 0.0
        %437 = vmatmul.mubr.f32.gmra.mxu0 %v351
        %v438 = vpop.f32.mrf.mxu0
        %v439 = vadd.f32 0.0, %v438
        %v440 = vpop.f32.mrf.mxu0
        %441 = vmatprep.mubr.f32.mxu0 0.0
        %442 = vmatmul.mubr.f32.gmra.mxu0 %v352
        %v443 = vpop.f32.mrf.mxu0
        %v444 = vadd.f32 0.0, %v443
        %v445 = vpop.f32.mrf.mxu0
        %446 = vdwg.mxu0
        %v447 = vadd.f32 %v353, %v439
        %v448 = vadd.f32 %v354, %v444
        %449 = vst [vmem:[#allocation3] sm:$0xff] %v447
        %450 = vst [vmem:[#allocation3 + $0x8] sm:$0xff] %v448
        %v451 = vld [vmem:[#allocation2 + $0x4] sm:$0xff]
        %v452 = vld [vmem:[#allocation2 + $0xc] sm:$0xff]
        %v453 = vld [vmem:[#allocation3] sm:$0xff]
        %v454 = vld [vmem:[#allocation3 + $0x8] sm:$0xff]
        %s455 = scalar_lea.vmem [#allocation7], 256
        %v456 = vld [vmem:[%s455] sm:$0xff]
        %v457 = vld [vmem:[%s455 + $0x8] sm:$0xff]
        %v458 = vld [vmem:[%s455 + $0x10] sm:$0xff]
        %v459 = vld [vmem:[%s455 + $0x18] sm:$0xff]
        %v460 = vld [vmem:[%s455 + $0x20] sm:$0xff]
        %v461 = vld [vmem:[%s455 + $0x28] sm:$0xff]
        %v462 = vld [vmem:[%s455 + $0x30] sm:$0xff]
        %v463 = vld [vmem:[%s455 + $0x38] sm:$0xff]
        %v464 = vld [vmem:[%s455 + $0x40] sm:$0xff]
        %v465 = vld [vmem:[%s455 + $0x48] sm:$0xff]
        %v466 = vld [vmem:[%s455 + $0x50] sm:$0xff]
        %v467 = vld [vmem:[%s455 + $0x58] sm:$0xff]
        %v468 = vld [vmem:[%s455 + $0x60] sm:$0xff]
        %v469 = vld [vmem:[%s455 + $0x68] sm:$0xff]
        %v470 = vld [vmem:[%s455 + $0x70] sm:$0xff]
        %v471 = vld [vmem:[%s455 + $0x78] sm:$0xff]
        %472 = vmatprep.subr.mxu0 0.0
        %473 = vmatpush1.msra.mxu0 %v471
        %474 = vmatprep.subr.mxu0 0.0
        %475 = vmatpush1.msra.mxu0 %v470
        %476 = vmatprep.subr.mxu0 0.0
        %477 = vmatpush1.msra.mxu0 %v469
        %478 = vmatprep.subr.mxu0 0.0
        %479 = vmatpush1.msra.mxu0 %v468
        %480 = vmatprep.subr.mxu0 0.0
        %481 = vmatpush1.msra.mxu0 %v467
        %482 = vmatprep.subr.mxu0 0.0
        %483 = vmatpush1.msra.mxu0 %v466
        %484 = vmatprep.subr.mxu0 0.0
        %485 = vmatpush1.msra.mxu0 %v465
        %486 = vmatprep.subr.mxu0 0.0
        %487 = vmatpush1.msra.mxu0 %v464
        %488 = vmatprep.subr.mxu0 0.0
        %489 = vmatpush1.msra.mxu0 %v463
        %490 = vmatprep.subr.mxu0 0.0
        %491 = vmatpush1.msra.mxu0 %v462
        %492 = vmatprep.subr.mxu0 0.0
        %493 = vmatpush1.msra.mxu0 %v461
        %494 = vmatprep.subr.mxu0 0.0
        %495 = vmatpush1.msra.mxu0 %v460
        %496 = vmatprep.subr.mxu0 0.0
        %497 = vmatpush1.msra.mxu0 %v459
        %498 = vmatprep.subr.mxu0 0.0
        %499 = vmatpush1.msra.mxu0 %v458
        %500 = vmatprep.subr.mxu0 0.0
        %501 = vmatpush1.msra.mxu0 %v457
        %502 = vmatprep.subr.mxu0 0.0
        %503 = vmatpush1.msra.mxu0 %v456
        %504 = vmatprep.subr.mxu0 0.0
        %505 = vmatpush2.msra.mxu0 0.0
        %506 = vmatprep.subr.mxu0 0.0
        %507 = vmatpush2.msra.mxu0 0.0
        %508 = vmatprep.subr.mxu0 0.0
        %509 = vmatpush2.msra.mxu0 0.0
        %510 = vmatprep.subr.mxu0 0.0
        %511 = vmatpush2.msra.mxu0 0.0
        %512 = vmatprep.subr.mxu0 0.0
        %513 = vmatpush2.msra.mxu0 0.0
        %514 = vmatprep.subr.mxu0 0.0
        %515 = vmatpush2.msra.mxu0 0.0
        %516 = vmatprep.subr.mxu0 0.0
        %517 = vmatpush2.msra.mxu0 0.0
        %518 = vmatprep.subr.mxu0 0.0
        %519 = vmatpush2.msra.mxu0 0.0
        %520 = vmatprep.subr.mxu0 0.0
        %521 = vmatpush2.msra.mxu0 0.0
        %522 = vmatprep.subr.mxu0 0.0
        %523 = vmatpush2.msra.mxu0 0.0
        %524 = vmatprep.subr.mxu0 0.0
        %525 = vmatpush2.msra.mxu0 0.0
        %526 = vmatprep.subr.mxu0 0.0
        %527 = vmatpush2.msra.mxu0 0.0
        %528 = vmatprep.subr.mxu0 0.0
        %529 = vmatpush2.msra.mxu0 0.0
        %530 = vmatprep.subr.mxu0 0.0
        %531 = vmatpush2.msra.mxu0 0.0
        %532 = vmatprep.subr.mxu0 0.0
        %533 = vmatpush2.msra.mxu0 0.0
        %534 = vmatprep.subr.mxu0 0.0
        %535 = vmatpush2.msra.mxu0 0.0
        %536 = vmatprep.mubr.f32.mxu0 0.0
        %537 = vmatmul.mubr.f32.gmra.mxu0 %v451
        %v538 = vpop.f32.mrf.mxu0
        %v539 = vadd.f32 0.0, %v538
        %v540 = vpop.f32.mrf.mxu0
        %541 = vmatprep.mubr.f32.mxu0 0.0
        %542 = vmatmul.mubr.f32.gmra.mxu0 %v452
        %v543 = vpop.f32.mrf.mxu0
        %v544 = vadd.f32 0.0, %v543
        %v545 = vpop.f32.mrf.mxu0
        %546 = vdwg.mxu0
        %v547 = vadd.f32 %v453, %v539
        %v548 = vadd.f32 %v454, %v544
        %549 = vst [vmem:[#allocation3] sm:$0xff] %v547
        %550 = vst [vmem:[#allocation3 + $0x8] sm:$0xff] %v548
        %v551 = vld [vmem:[#allocation3] sm:$0xff]
        %v552 = vld [vmem:[#allocation3 + $0x8] sm:$0xff]
        %v553 = vmul.f32 %v551, 0.70710677
        %v554 = vmul.f32 %v552, 0.70710677
        %555 = vst [vmem:[%s221] sm:$0xff] %v553
        %556 = vst [vmem:[%s221 + $0x8] sm:$0xff] %v554
        %s557 = sand.u32 %s113, 1
        %s558 = scalar_lea.sflag [#allocation6], %s557
        %s559 = sand.u32 %s113, 1
        %s560 = smul.addr %s559, 16
        %s561 = scalar_lea.vmem [#allocation9], %s560
        // Predicated region
        $region41: #{tpu_custom_call.1} parent=31 // pred_check
          %p562 = pneg %p123
        $region42: #{tpu_custom_call.1} parent=31 // pred_check_branch
          %564 = sbr.rel (%p562) target = $region44
        $region43: #{tpu_custom_call.1} parent=31 // pred_region
          %s565 = smul.u32 2, %s26
          %s567 = ssub.s32 256, 256
          %568 = vsyncadd %s558, %s567
          %s569 = smul.addr %s25, 2
          %s570 = sadd.s32 %s565, %s569
          %s571 = smul.addr %s570, 128
          %s572 = scalar_lea.hbm %s3, %s571
          %s573 = sshll.u32 %s561, 4
          %s574 = int_to_ptr.vmem [resolvable:$true] %s573
          %579 = dma.vmem_to_hbm [thread:$0]  %s574, 256, %s572, %s558, 128, 128, 8
        $region44: #{tpu_custom_call.1} parent=31 // pred_fallthru
          _
      $region32: #{tpu_custom_call.1} parent=5 // pred_fallthru
        _
      %p580 = scmp.le.s32.totalorder 2, %s16
      // Predicated region
      $region45: #{tpu_custom_call.1} parent=5 // pred_check
        %p581 = pneg %p580
      $region46: #{tpu_custom_call.1} parent=5 // pred_check_branch
        %583 = sbr.rel (%p581) target = $region48
      $region47: #{tpu_custom_call.1} parent=5 // pred_region
        %s584 = ssub.s32 %s16, 2
        // Predicated region
        $region49: #{tpu_custom_call.1} parent=47 // pred_check
          %p585 = pneg %p129
        $region50: #{tpu_custom_call.1} parent=47 // pred_check_branch
          %587 = sbr.rel (%p585) target = $region52
        $region51: #{tpu_custom_call.1} parent=47 // pred_region
          %s588 = sand.u32 %s114, 1
          %s589 = scalar_lea.sflag [#allocation6], %s588
          %s590 = sand.u32 %s114, 1
          %s591 = smul.addr %s590, 16
          %s592 = scalar_lea.vmem [#allocation9], %s591
          %593 = dma.done %s589, 256
        $region52: #{tpu_custom_call.1} parent=47 // pred_fallthru
          _
      $region48: #{tpu_custom_call.1} parent=5 // pred_fallthru
        _
    $region6: #{tpu_custom_call.1} parent=1 // loop_footer
      %s20 = sadd.s32 1, %s16
    $region7: #{tpu_custom_call.1} parent=1 // loop_footer_branch
      %15 = sbr.rel target = $region3
    $region8: #{tpu_custom_call.1} parent=1 // loop_exit
      _
    %594 = vsyncpa [#allocation5], 1
    %s595 = scalar_lea.sflag [#allocation5], 1
    %596 = vsyncpa %s595, 1
    %597 = vsyncpa [#allocation8], 1
    %598 = vsyncpa [#allocation6], 1
    %s599 = scalar_lea.sflag [#allocation6], 1
    %600 = vsyncpa %s599, 1

</llo_original>
